<compile_context>
chip_gen: v7x
topology: tpu7x:2x2x1
jax: 0.10.0
libtpu: 0.0.40
codegen_flags: <defaults>
</compile_context>

<pallas_src>
import math

import jax
import jax.numpy as jnp
from jax import lax
from jax.experimental import pallas as pl
from jax.experimental.pallas import tpu as pltpu


def _round_up(a, m):
    return (a + m - 1) // m * m


# ---------------------------------------------------------------------------
# Pallas kernel:  out = x + onehot(g) @ table_bd
#   x_ref   : [TM, F*C]  x.dtype   (F logical rows folded per kernel row)
#   g_ref   : [TM, F]    int32     (t + f*M1pad offsets, one per folded row)
#   tab_ref : [F*M1pad, F*C] f32   block-diagonal projected table (resident)
# ---------------------------------------------------------------------------
def posemb_kernel(x_ref, g_ref, tab_ref, o_ref):
    tm = x_ref.shape[0]
    k = tab_ref.shape[0]
    fold = g_ref.shape[1]

    g = g_ref[...]                                              # [TM, F] int32
    iota_k = lax.broadcasted_iota(jnp.int32, (tm, k), 1)        # [TM, K]

    onehot = jnp.zeros((tm, k), dtype=jnp.float32)
    for f in range(fold):                                       # static unroll, F small
        onehot = onehot + (g[:, f:f + 1] == iota_k).astype(jnp.float32)

    # Tiny MXU matmul selects (and concatenates) the projected embedding rows.
    # HIGHEST precision keeps the f32 table exact; extra MXU passes are free
    # because the kernel is HBM-bandwidth bound.
    y = jnp.dot(onehot, tab_ref[...],
                preferred_element_type=jnp.float32,
                precision=lax.Precision.HIGHEST)

    # Upcast x in-register, add in f32, store in the native output dtype.
    o_ref[...] = (x_ref[...].astype(jnp.float32) + y).astype(o_ref.dtype)


# ---------------------------------------------------------------------------
# Wrapper
# ---------------------------------------------------------------------------
def positional_embedding_pallas(x, t, emb_table, w, b):
    """x: [..., C] float (f32/bf16), t: [...] int, emb_table: [max_index+1, C],
    w: [C, C] (PyTorch Linear weight: out = e @ w.T + b), b: [C]."""
    orig_shape = x.shape
    orig_dtype = x.dtype
    C = int(orig_shape[-1])
    N = int(x.size // C)
    M1 = int(emb_table.shape[0])                 # max_index + 1

    # --- hoist the projection onto the tiny table (no w.T materialization) ---
    proj = lax.dot_general(
        emb_table.astype(jnp.float32), w.astype(jnp.float32),
        dimension_numbers=(((1,), (1,)), ((), ())),
        preferred_element_type=jnp.float32,
    ) + b.astype(jnp.float32)[None, :]           # [M1, C] = E @ W^T + b

    # --- row folding for a lane-dense output when C divides 128 -------------
    # Only fold when N is already a multiple of F so NO padding pass over x is
    # ever needed; otherwise fall back to F=1 (masked stores, still correct).
    if C < 128 and 128 % C == 0 and C >= 8 and N % (128 // C) == 0:
        F = 128 // C
    else:
        F = 1
    FC = F * C
    Nf = N // F

    # Pad the table rows so each diagonal block has a nice, fixed size
    # (K = F*M1pad is the matmul contraction dim -> keep it lane-friendly).
    M1pad = _round_up(M1, max(8, pl.cdiv(128, F)))
    K = F * M1pad
    proj_pad = jnp.zeros((M1pad, C), jnp.float32).at[:M1].set(proj)
    if F == 1:
        table_bd = proj_pad                                        # [K, C]
    else:
        # NOTE: for very large max_index the F-fold replication here becomes
        # the VMEM driver; a plain [M1pad, C] table with F per-slice matmuls
        # would be preferable then.  Irrelevant at typical time-embedding sizes.
        eye = jnp.eye(F, dtype=jnp.float32)
        table_bd = jnp.einsum('fg,mc->fmgc', eye, proj_pad).reshape(K, FC)

    # --- tile size: big tiles amortize the ~0.35us/step overhead ------------
    # Budget accounts for: double-buffered x/out/g tiles, double-buffered
    # resident table, and the in-kernel one-hot / matmul f32 intermediates.
    itemsize = jnp.dtype(orig_dtype).itemsize
    table_bytes = 2 * K * FC * 4                         # double-buffered table
    dma_per_row = 2 * (2 * FC * itemsize + F * 4)        # x + out + g, x2 bufs
    scratch_per_row = 2 * K * 4 + 2 * FC * 4             # iota/onehot + y/upcast
    per_row = dma_per_row + scratch_per_row
    budget = 40 * 1024 * 1024
    avail = max(budget - table_bytes, 1 << 20)
    TM = min(4096, max(16, (avail // per_row) // 16 * 16))
    if Nf > 32:
        # keep >= 2 grid steps so both v7x TensorCores get work
        TM = min(TM, _round_up(pl.cdiv(Nf, 2), 16))
    if TM >= Nf:
        TM = Nf                                  # single full-extent block

    # --- metadata-only reshapes: no extra HBM pass over x -------------------
    x_f = x.reshape(Nf, FC)                                      # lane-dense rows
    t1 = t.reshape(N).astype(jnp.int32)
    g = t1.reshape(Nf, F) + (jnp.arange(F, dtype=jnp.int32) * M1pad)[None, :]

    grid = (pl.cdiv(Nf, TM),)
    out = pl.pallas_call(
        posemb_kernel,
        out_shape=jax.ShapeDtypeStruct((Nf, FC), orig_dtype),
        grid_spec=pltpu.PrefetchScalarGridSpec(
            num_scalar_prefetch=0,
            grid=grid,
            in_specs=[
                pl.BlockSpec((TM, FC), lambda i: (i, 0)),        # x (folded rows)
                pl.BlockSpec((TM, F), lambda i: (i, 0)),         # offset indices
                pl.BlockSpec((K, FC), lambda i: (0, 0)),         # resident table
            ],
            out_specs=pl.BlockSpec((TM, FC), lambda i: (i, 0)),
        ),
        compiler_params=pltpu.CompilerParams(
            dimension_semantics=("parallel",),                   # rows independent
            vmem_limit_bytes=48 * 1024 * 1024,
        ),
    )(x_f, g, table_bd)

    return out.reshape(orig_shape)


# ---------------------------------------------------------------------------
# Deterministic parameter construction (mirrors the PyTorch __init__)
# ---------------------------------------------------------------------------
def make_params(channels, max_index, key):
    position = jnp.arange(max_index, dtype=jnp.float32)[:, None]        # [M, 1]
    div_term = jnp.exp(
        jnp.arange(0, channels, 2, dtype=jnp.float32)
        * (-math.log(10000.0) / channels)
    )                                                                    # [C/2]
    sin_part = jnp.sin(position * div_term) / math.sqrt(channels)
    cos_part = jnp.cos(position * div_term) / math.sqrt(channels)

    table = jnp.zeros((max_index + 1, channels), dtype=jnp.float32)
    table = table.at[1:, 0::2].set(sin_part)
    table = table.at[1:, 1::2].set(cos_part)

    kw, kb = jax.random.split(key)
    bound = 1.0 / math.sqrt(channels)
    w = jax.random.uniform(kw, (channels, channels), jnp.float32, -bound, bound)
    b = jax.random.uniform(kb, (channels,), jnp.float32, -bound, bound)
    return table, w, b


if __name__ == "__main__":
    channels = 32
    max_index = 16
    batch, seq = 2, 8

    key = jax.random.PRNGKey(0)
    k_params, k_x, k_t = jax.random.split(key, 3)

    emb_table, w, b = make_params(channels, max_index, k_params)

    x = jax.random.normal(k_x, (batch, seq, channels), dtype=jnp.float32)
    t = jax.random.randint(k_t, (batch, seq), 0, max_index + 1, dtype=jnp.int32)

    out = positional_embedding_pallas(x, t, emb_table, w, b)
    out = jax.block_until_ready(out)

    # Pure-JAX reference check (mirrors the PyTorch forward).
    e_ref = jnp.take(emb_table, t.reshape(-1), axis=0).reshape(batch, seq, channels)
    ref = x + (e_ref @ w.T + b)
    assert out.shape == x.shape and out.dtype == x.dtype
    assert jnp.max(jnp.abs(out - ref)) < 1e-4

    print("KERNEL_OK")
</pallas_src>

<mosaic_0001>
module attributes {stable_mosaic.version = 11 : i64} {
  func.func @posemb_kernel(%arg0: i32, %arg1: memref<4x128xf32, #tpu.memory_space<vmem>>, %arg2: memref<4x4xi32, #tpu.memory_space<vmem>>, %arg3: memref<128x128xf32, #tpu.memory_space<vmem>>, %arg4: memref<4x128xf32, #tpu.memory_space<vmem>>) attributes {dimension_semantics = [#tpu.dimension_semantics<parallel>], iteration_bounds = array<i64: 1>, scalar_prefetch = 0 : i64, scratch_operands = 0 : i64, tpu.core_type = #tpu.core_type<tc>, window_params = [{transform_indices = @transform_0, window_bounds = array<i64: 4, 128>}, {transform_indices = @transform_1, window_bounds = array<i64: 4, 4>}, {pipeline_mode = #tpu.pipeline_mode<synchronous>, transform_indices = @transform_2, window_bounds = array<i64: 128, 128>}, {transform_indices = @transform_3, window_bounds = array<i64: 4, 128>}]} {
    %c0 = arith.constant 0 : index
    %c0_0 = arith.constant 0 : index
    %0 = vector.load %arg2[%c0, %c0_0] : memref<4x4xi32, #tpu.memory_space<vmem>>, vector<4x4xi32>
    %1 = tpu.iota {dimensions = array<i32: 1>} : vector<4x128xi32>
    %cst = arith.constant 0.000000e+00 : f32
    %2 = vector.broadcast %cst : f32 to vector<4x128xf32>
    %3 = vector.extract_strided_slice %0 {offsets = [0, 0], sizes = [4, 1], strides = [1, 1]} : vector<4x4xi32> to vector<4x1xi32>
    %4 = vector.broadcast %3 : vector<4x1xi32> to vector<4x128xi32>
    %5 = arith.cmpi eq, %4, %1 : vector<4x128xi32>
    %6 = arith.extui %5 : vector<4x128xi1> to vector<4x128xi32>
    %7 = arith.sitofp %6 : vector<4x128xi32> to vector<4x128xf32>
    %8 = arith.addf %2, %7 : vector<4x128xf32>
    %9 = vector.extract_strided_slice %0 {offsets = [0, 1], sizes = [4, 1], strides = [1, 1]} : vector<4x4xi32> to vector<4x1xi32>
    %10 = vector.broadcast %9 : vector<4x1xi32> to vector<4x128xi32>
    %11 = arith.cmpi eq, %10, %1 : vector<4x128xi32>
    %12 = arith.extui %11 : vector<4x128xi1> to vector<4x128xi32>
    %13 = arith.sitofp %12 : vector<4x128xi32> to vector<4x128xf32>
    %14 = arith.addf %8, %13 : vector<4x128xf32>
    %15 = vector.extract_strided_slice %0 {offsets = [0, 2], sizes = [4, 1], strides = [1, 1]} : vector<4x4xi32> to vector<4x1xi32>
    %16 = vector.broadcast %15 : vector<4x1xi32> to vector<4x128xi32>
    %17 = arith.cmpi eq, %16, %1 : vector<4x128xi32>
    %18 = arith.extui %17 : vector<4x128xi1> to vector<4x128xi32>
    %19 = arith.sitofp %18 : vector<4x128xi32> to vector<4x128xf32>
    %20 = arith.addf %14, %19 : vector<4x128xf32>
    %21 = vector.extract_strided_slice %0 {offsets = [0, 3], sizes = [4, 1], strides = [1, 1]} : vector<4x4xi32> to vector<4x1xi32>
    %22 = vector.broadcast %21 : vector<4x1xi32> to vector<4x128xi32>
    %23 = arith.cmpi eq, %22, %1 : vector<4x128xi32>
    %24 = arith.extui %23 : vector<4x128xi1> to vector<4x128xi32>
    %25 = arith.sitofp %24 : vector<4x128xi32> to vector<4x128xf32>
    %26 = arith.addf %20, %25 : vector<4x128xf32>
    %c0_1 = arith.constant 0 : index
    %c0_2 = arith.constant 0 : index
    %27 = vector.load %arg3[%c0_1, %c0_2] : memref<128x128xf32, #tpu.memory_space<vmem>>, vector<128x128xf32>
    %cst_3 = arith.constant dense<0.000000e+00> : vector<4x128xf32>
    %28 = tpu.matmul %26, %27, %cst_3 {dimension_numbers = #tpu.dot_dimension_numbers<[1], [0], [0], [1], [0, 0, 1, 1], [], []>, precision = #tpu.contract_precision<fp32>} : vector<4x128xf32>, vector<128x128xf32>, vector<4x128xf32> -> vector<4x128xf32>
    %c0_4 = arith.constant 0 : index
    %c0_5 = arith.constant 0 : index
    %29 = vector.load %arg1[%c0_4, %c0_5] : memref<4x128xf32, #tpu.memory_space<vmem>>, vector<4x128xf32>
    %30 = arith.addf %29, %28 : vector<4x128xf32>
    %c0_6 = arith.constant 0 : index
    %c0_7 = arith.constant 0 : index
    %31 = vector.load %arg4[%c0_6, %c0_7] : memref<4x128xf32, #tpu.memory_space<vmem>>, vector<4x128xf32>
    tpu.vector_store %arg4[%c0_6, %c0_7], %30 {strides = array<i32>} : memref<4x128xf32, #tpu.memory_space<vmem>>, vector<4x128xf32>,
    return
  }
  func.func @transform_0(%arg0: i32) -> (i32, i32) {
    %c0_i32 = arith.constant 0 : i32
    %c0_i32_0 = arith.constant 0 : i32
    return %arg0, %c0_i32 : i32, i32
  }
  func.func @transform_1(%arg0: i32) -> (i32, i32) {
    %c0_i32 = arith.constant 0 : i32
    %c0_i32_0 = arith.constant 0 : i32
    return %arg0, %c0_i32 : i32, i32
  }
  func.func @transform_2(%arg0: i32) -> (i32, i32) {
    %c0_i32 = arith.constant 0 : i32
    %c0_i32_0 = arith.constant 0 : i32
    %c0_i32_1 = arith.constant 0 : i32
    return %c0_i32, %c0_i32_0 : i32, i32
  }
  func.func @transform_3(%arg0: i32) -> (i32, i32) {
    %c0_i32 = arith.constant 0 : i32
    %c0_i32_0 = arith.constant 0 : i32
    return %arg0, %c0_i32 : i32, i32
  }
}

</mosaic_0001>

<llo_original>
// kernel: tpu_custom_call.1
$region0: #{tpu_custom_call.1}
  #allocation0 [shape = 'u32[]', space=smem, size = 0x4, offset = 0x4, fixed_abs, tag = 'smem constant byte address 0x4 - core index']
  #allocation1 [shape = 'u32[144,128]{1,0:T(1,128)}', space=vmem, size = 0x12000, scoped, tag = 'internal scratch']
  %s0 = inlined_call_operand.hbm [shape: f32[4,128], index: 0, kind: input, shape index: {}]
  %s1 = inlined_call_operand.hbm [shape: s32[4,4], index: 1, kind: input, shape index: {}]
  %s2 = inlined_call_operand.hbm [shape: f32[128,128], index: 2, kind: input, shape index: {}]
  %s3 = inlined_call_operand.hbm [shape: f32[4,128], index: 3, kind: output, shape index: {}]
  %s4 = sld [smem:[#allocation0]]
  $region34: #{tpu_custom_call.1} parent=0
    _
  %s6 = ssub.s32 1, %s4
  %s7 = scalar_select 0, %s6, %s4
  $region1: #{tpu_custom_call.1} parent=0
    #allocation2 [shape = 'u8[2048]{0}', space=vmem, size = 0x800, scoped, tag = 'input window, operand 0, single buffered']
    #allocation3 [shape = 's32[1]{0}', space=sflag, size = 0x4, scoped, tag = 'scoped memory for tpu_custom_call.1']
    #allocation4 [shape = 's32[1]{0}', space=sflag, size = 0x4, scoped, tag = 'scoped memory for tpu_custom_call.1']
    #allocation5 [shape = 'u8[2048]{0}', space=vmem, size = 0x800, scoped, tag = 'input window, operand 1, single buffered']
    #allocation6 [shape = 's32[1]{0}', space=sflag, size = 0x4, scoped, tag = 'scoped memory for tpu_custom_call.1']
    #allocation7 [shape = 'u8[65536]{0}', space=vmem, size = 0x10000, scoped, tag = 'input window, operand 2, single buffered']
    #allocation8 [shape = 'u8[2048]{0}', space=vmem, size = 0x800, scoped, tag = 'output window, operand 0, single buffered']
    %8 = vsyncpa [#allocation3], 0
    %9 = vsyncpa [#allocation6], 0
    %10 = vsyncpa [#allocation4], 0
    // Predicated region
    $region2: #{tpu_custom_call.1} parent=1 // pred_check
      _
    $region3: #{tpu_custom_call.1} parent=1 // pred_check_branch
      %12 = sbr.rel (0) target = $region5
    $region4: #{tpu_custom_call.1} parent=1 // pred_region
      %s14 = ssub.s32 64, 64
      %15 = vsyncadd [#allocation3], %s14
      %s17 = sshll.u32 [#allocation2], 4
      %s18 = int_to_ptr.vmem [resolvable:$true] %s17
      %20 = dma.hbm_to_vmem [thread:$0]  %s0, 64, %s18, [#allocation3]
    $region5: #{tpu_custom_call.1} parent=1 // pred_fallthru
      _
    // Predicated region
    $region6: #{tpu_custom_call.1} parent=1 // pred_check
      _
    $region7: #{tpu_custom_call.1} parent=1 // pred_check_branch
      %22 = sbr.rel (0) target = $region9
    $region8: #{tpu_custom_call.1} parent=1 // pred_region
      %s24 = ssub.s32 64, 64
      %25 = vsyncadd [#allocation6], %s24
      %s27 = sshll.u32 [#allocation5], 4
      %s28 = int_to_ptr.vmem [resolvable:$true] %s27
      %30 = dma.hbm_to_vmem [thread:$0]  %s1, 64, %s28, [#allocation6]
    $region9: #{tpu_custom_call.1} parent=1 // pred_fallthru
      _
    // Predicated region
    $region10: #{tpu_custom_call.1} parent=1 // pred_check
      _
    $region11: #{tpu_custom_call.1} parent=1 // pred_check_branch
      %32 = sbr.rel (0) target = $region13
    $region12: #{tpu_custom_call.1} parent=1 // pred_region
      %s34 = ssub.s32 2048, 2048
      %35 = vsyncadd [#allocation6], %s34
      %s36 = sshll.u32 [#allocation7], 4
      %s37 = int_to_ptr.vmem [resolvable:$true] %s36
      %42 = dma.hbm_to_vmem [thread:$0]  %s2, 2048, %s37, [#allocation6], 128, 128, 8
    $region13: #{tpu_custom_call.1} parent=1 // pred_fallthru
      _
    // Predicated region
    $region14: #{tpu_custom_call.1} parent=1 // pred_check
      _
    $region15: #{tpu_custom_call.1} parent=1 // pred_check_branch
      %44 = sbr.rel (0) target = $region17
    $region16: #{tpu_custom_call.1} parent=1 // pred_region
      %45 = dma.done [#allocation3], 64
    $region17: #{tpu_custom_call.1} parent=1 // pred_fallthru
      _
    // Predicated region
    $region18: #{tpu_custom_call.1} parent=1 // pred_check
      _
    $region19: #{tpu_custom_call.1} parent=1 // pred_check_branch
      %47 = sbr.rel (0) target = $region21
    $region20: #{tpu_custom_call.1} parent=1 // pred_region
      %48 = dma.done [#allocation6], 64
    $region21: #{tpu_custom_call.1} parent=1 // pred_fallthru
      _
    // Predicated region
    $region22: #{tpu_custom_call.1} parent=1 // pred_check
      _
    $region23: #{tpu_custom_call.1} parent=1 // pred_check_branch
      %50 = sbr.rel (0) target = $region25
    $region24: #{tpu_custom_call.1} parent=1 // pred_region
      %51 = dma.done [#allocation6], 2048
    $region25: #{tpu_custom_call.1} parent=1 // pred_fallthru
      _
    %v52 = vld [vmem:[#allocation5] sm:$0xf]
    %v53 = vlaneseq
    %v54 = vand.u32 %v53, 127
    %55 = vset.pattern.permute.xlu0 0
    %56 = vperm.xlu0 %55, %v52
    %v57 = vpop.permute.xlu0 %56
    %vm58 = vcmp.eq.s32.totalorder %v57, %v54
    %v59 = vsel %vm58, 1, 0
    %v60 = vcvt.s32.f32 %v59
    %v61 = vadd.f32 %v60, 0.0
    %62 = vset.pattern.permute.xlu0 1
    %63 = vperm.xlu0 %62, %v52
    %v64 = vpop.permute.xlu0 %63
    %vm65 = vcmp.eq.s32.totalorder %v64, %v54
    %v66 = vsel %vm65, 1, 0
    %v67 = vcvt.s32.f32 %v66
    %v68 = vadd.f32 %v61, %v67
    %69 = vset.pattern.permute.xlu0 2
    %70 = vperm.xlu0 %69, %v52
    %v71 = vpop.permute.xlu0 %70
    %vm72 = vcmp.eq.s32.totalorder %v71, %v54
    %v73 = vsel %vm72, 1, 0
    %v74 = vcvt.s32.f32 %v73
    %v75 = vadd.f32 %v68, %v74
    %76 = vset.pattern.permute.xlu0 3
    %77 = vperm.xlu0 %76, %v52
    %v78 = vpop.permute.xlu0 %77
    %vm79 = vcmp.eq.s32.totalorder %v78, %v54
    %v80 = vsel %vm79, 1, 0
    %v81 = vcvt.s32.f32 %v80
    %v82 = vadd.f32 %v75, %v81
    %v83 = vld [vmem:[#allocation7] sm:$0xff]
    %v84 = vld [vmem:[#allocation7 + $0x8] sm:$0xff]
    %v85 = vld [vmem:[#allocation7 + $0x10] sm:$0xff]
    %v86 = vld [vmem:[#allocation7 + $0x18] sm:$0xff]
    %v87 = vld [vmem:[#allocation7 + $0x20] sm:$0xff]
    %v88 = vld [vmem:[#allocation7 + $0x28] sm:$0xff]
    %v89 = vld [vmem:[#allocation7 + $0x30] sm:$0xff]
    %v90 = vld [vmem:[#allocation7 + $0x38] sm:$0xff]
    %v91 = vld [vmem:[#allocation7 + $0x40] sm:$0xff]
    %v92 = vld [vmem:[#allocation7 + $0x48] sm:$0xff]
    %v93 = vld [vmem:[#allocation7 + $0x50] sm:$0xff]
    %v94 = vld [vmem:[#allocation7 + $0x58] sm:$0xff]
    %v95 = vld [vmem:[#allocation7 + $0x60] sm:$0xff]
    %v96 = vld [vmem:[#allocation7 + $0x68] sm:$0xff]
    %v97 = vld [vmem:[#allocation7 + $0x70] sm:$0xff]
    %v98 = vld [vmem:[#allocation7 + $0x78] sm:$0xff]
    %99 = vmatprep.subr.mxu0 0.0
    %v100 = vand.u32 %v83, 4294901760
    %101 = vmatpush1.msra.mxu0 %v100
    %102 = vmatprep.subr.mxu0 0.0
    %v103 = vand.u32 %v84, 4294901760
    %104 = vmatpush1.msra.mxu0 %v103
    %105 = vmatprep.subr.mxu0 0.0
    %v106 = vand.u32 %v85, 4294901760
    %107 = vmatpush1.msra.mxu0 %v106
    %108 = vmatprep.subr.mxu0 0.0
    %v109 = vand.u32 %v86, 4294901760
    %110 = vmatpush1.msra.mxu0 %v109
    %111 = vmatprep.subr.mxu0 0.0
    %v112 = vand.u32 %v87, 4294901760
    %113 = vmatpush1.msra.mxu0 %v112
    %114 = vmatprep.subr.mxu0 0.0
    %v115 = vand.u32 %v88, 4294901760
    %116 = vmatpush1.msra.mxu0 %v115
    %117 = vmatprep.subr.mxu0 0.0
    %v118 = vand.u32 %v89, 4294901760
    %119 = vmatpush1.msra.mxu0 %v118
    %120 = vmatprep.subr.mxu0 0.0
    %v121 = vand.u32 %v90, 4294901760
    %122 = vmatpush1.msra.mxu0 %v121
    %123 = vmatprep.subr.mxu0 0.0
    %v124 = vand.u32 %v91, 4294901760
    %125 = vmatpush1.msra.mxu0 %v124
    %126 = vmatprep.subr.mxu0 0.0
    %v127 = vand.u32 %v92, 4294901760
    %128 = vmatpush1.msra.mxu0 %v127
    %129 = vmatprep.subr.mxu0 0.0
    %v130 = vand.u32 %v93, 4294901760
    %131 = vmatpush1.msra.mxu0 %v130
    %132 = vmatprep.subr.mxu0 0.0
    %v133 = vand.u32 %v94, 4294901760
    %134 = vmatpush1.msra.mxu0 %v133
    %135 = vmatprep.subr.mxu0 0.0
    %v136 = vand.u32 %v95, 4294901760
    %137 = vmatpush1.msra.mxu0 %v136
    %138 = vmatprep.subr.mxu0 0.0
    %v139 = vand.u32 %v96, 4294901760
    %140 = vmatpush1.msra.mxu0 %v139
    %141 = vmatprep.subr.mxu0 0.0
    %v142 = vand.u32 %v97, 4294901760
    %143 = vmatpush1.msra.mxu0 %v142
    %144 = vmatprep.subr.mxu0 0.0
    %v145 = vand.u32 %v98, 4294901760
    %146 = vmatpush1.msra.mxu0 %v145
    %147 = vmatprep.subr.mxu0 0.0
    %148 = vmatpush1.msra.mxu0 0.0
    %149 = vmatprep.subr.mxu0 0.0
    %150 = vmatpush1.msra.mxu0 0.0
    %151 = vmatprep.subr.mxu0 0.0
    %152 = vmatpush1.msra.mxu0 0.0
    %153 = vmatprep.subr.mxu0 0.0
    %154 = vmatpush1.msra.mxu0 0.0
    %155 = vmatprep.subr.mxu0 0.0
    %156 = vmatpush1.msra.mxu0 0.0
    %157 = vmatprep.subr.mxu0 0.0
    %158 = vmatpush1.msra.mxu0 0.0
    %159 = vmatprep.subr.mxu0 0.0
    %160 = vmatpush1.msra.mxu0 0.0
    %161 = vmatprep.subr.mxu0 0.0
    %162 = vmatpush1.msra.mxu0 0.0
    %163 = vmatprep.subr.mxu0 0.0
    %164 = vmatpush1.msra.mxu0 0.0
    %165 = vmatprep.subr.mxu0 0.0
    %166 = vmatpush1.msra.mxu0 0.0
    %167 = vmatprep.subr.mxu0 0.0
    %168 = vmatpush1.msra.mxu0 0.0
    %169 = vmatprep.subr.mxu0 0.0
    %170 = vmatpush1.msra.mxu0 0.0
    %171 = vmatprep.subr.mxu0 0.0
    %172 = vmatpush1.msra.mxu0 0.0
    %173 = vmatprep.subr.mxu0 0.0
    %174 = vmatpush1.msra.mxu0 0.0
    %175 = vmatprep.subr.mxu0 0.0
    %176 = vmatpush1.msra.mxu0 0.0
    %177 = vmatprep.subr.mxu0 0.0
    %178 = vmatpush1.msra.mxu0 0.0
    %179 = vmatprep.mubr.f32.mxu0 0.0
    %v180 = vand.u32 %v82, 4294901760
    %v181 = vsub.f32 %v82, %v180
    %v182 = vand.u32 %v181, 4294901760
    %v183 = vsub.f32 %v181, %v182
    %v184 = vand.u32 %v183, 4294901760
    %185 = vmatmul.mubr.f32.gmra.mrb[0].mxu0 %v184
    %v186 = vpop.f32.mrb[0].mxu0
    %v187 = vadd.f32 0.0, %v186
    %v188 = vpop.f32.mrb[0].mxu0
    %189 = vdwg.mxu0
    %190 = vmatprep.subr.mxu0 0.0
    %v191 = vand.u32 %v83, 4294901760
    %v192 = vsub.f32 %v83, %v191
    %v193 = vand.u32 %v192, 4294901760
    %v194 = vsub.f32 %v192, %v193
    %v195 = vand.u32 %v194, 4294901760
    %196 = vmatpush1.msra.mxu0 %v195
    %197 = vmatprep.subr.mxu0 0.0
    %v198 = vand.u32 %v84, 4294901760
    %v199 = vsub.f32 %v84, %v198
    %v200 = vand.u32 %v199, 4294901760
    %v201 = vsub.f32 %v199, %v200
    %v202 = vand.u32 %v201, 4294901760
    %203 = vmatpush1.msra.mxu0 %v202
    %204 = vmatprep.subr.mxu0 0.0
    %v205 = vand.u32 %v85, 4294901760
    %v206 = vsub.f32 %v85, %v205
    %v207 = vand.u32 %v206, 4294901760
    %v208 = vsub.f32 %v206, %v207
    %v209 = vand.u32 %v208, 4294901760
    %210 = vmatpush1.msra.mxu0 %v209
    %211 = vmatprep.subr.mxu0 0.0
    %v212 = vand.u32 %v86, 4294901760
    %v213 = vsub.f32 %v86, %v212
    %v214 = vand.u32 %v213, 4294901760
    %v215 = vsub.f32 %v213, %v214
    %v216 = vand.u32 %v215, 4294901760
    %217 = vmatpush1.msra.mxu0 %v216
    %218 = vmatprep.subr.mxu0 0.0
    %v219 = vand.u32 %v87, 4294901760
    %v220 = vsub.f32 %v87, %v219
    %v221 = vand.u32 %v220, 4294901760
    %v222 = vsub.f32 %v220, %v221
    %v223 = vand.u32 %v222, 4294901760
    %224 = vmatpush1.msra.mxu0 %v223
    %225 = vmatprep.subr.mxu0 0.0
    %v226 = vand.u32 %v88, 4294901760
    %v227 = vsub.f32 %v88, %v226
    %v228 = vand.u32 %v227, 4294901760
    %v229 = vsub.f32 %v227, %v228
    %v230 = vand.u32 %v229, 4294901760
    %231 = vmatpush1.msra.mxu0 %v230
    %232 = vmatprep.subr.mxu0 0.0
    %v233 = vand.u32 %v89, 4294901760
    %v234 = vsub.f32 %v89, %v233
    %v235 = vand.u32 %v234, 4294901760
    %v236 = vsub.f32 %v234, %v235
    %v237 = vand.u32 %v236, 4294901760
    %238 = vmatpush1.msra.mxu0 %v237
    %239 = vmatprep.subr.mxu0 0.0
    %v240 = vand.u32 %v90, 4294901760
    %v241 = vsub.f32 %v90, %v240
    %v242 = vand.u32 %v241, 4294901760
    %v243 = vsub.f32 %v241, %v242
    %v244 = vand.u32 %v243, 4294901760
    %245 = vmatpush1.msra.mxu0 %v244
    %246 = vmatprep.subr.mxu0 0.0
    %v247 = vand.u32 %v91, 4294901760
    %v248 = vsub.f32 %v91, %v247
    %v249 = vand.u32 %v248, 4294901760
    %v250 = vsub.f32 %v248, %v249
    %v251 = vand.u32 %v250, 4294901760
    %252 = vmatpush1.msra.mxu0 %v251
    %253 = vmatprep.subr.mxu0 0.0
    %v254 = vand.u32 %v92, 4294901760
    %v255 = vsub.f32 %v92, %v254
    %v256 = vand.u32 %v255, 4294901760
    %v257 = vsub.f32 %v255, %v256
    %v258 = vand.u32 %v257, 4294901760
    %259 = vmatpush1.msra.mxu0 %v258
    %260 = vmatprep.subr.mxu0 0.0
    %v261 = vand.u32 %v93, 4294901760
    %v262 = vsub.f32 %v93, %v261
    %v263 = vand.u32 %v262, 4294901760
    %v264 = vsub.f32 %v262, %v263
    %v265 = vand.u32 %v264, 4294901760
    %266 = vmatpush1.msra.mxu0 %v265
    %267 = vmatprep.subr.mxu0 0.0
    %v268 = vand.u32 %v94, 4294901760
    %v269 = vsub.f32 %v94, %v268
    %v270 = vand.u32 %v269, 4294901760
    %v271 = vsub.f32 %v269, %v270
    %v272 = vand.u32 %v271, 4294901760
    %273 = vmatpush1.msra.mxu0 %v272
    %274 = vmatprep.subr.mxu0 0.0
    %v275 = vand.u32 %v95, 4294901760
    %v276 = vsub.f32 %v95, %v275
    %v277 = vand.u32 %v276, 4294901760
    %v278 = vsub.f32 %v276, %v277
    %v279 = vand.u32 %v278, 4294901760
    %280 = vmatpush1.msra.mxu0 %v279
    %281 = vmatprep.subr.mxu0 0.0
    %v282 = vand.u32 %v96, 4294901760
    %v283 = vsub.f32 %v96, %v282
    %v284 = vand.u32 %v283, 4294901760
    %v285 = vsub.f32 %v283, %v284
    %v286 = vand.u32 %v285, 4294901760
    %287 = vmatpush1.msra.mxu0 %v286
    %288 = vmatprep.subr.mxu0 0.0
    %v289 = vand.u32 %v97, 4294901760
    %v290 = vsub.f32 %v97, %v289
    %v291 = vand.u32 %v290, 4294901760
    %v292 = vsub.f32 %v290, %v291
    %v293 = vand.u32 %v292, 4294901760
    %294 = vmatpush1.msra.mxu0 %v293
    %295 = vmatprep.subr.mxu0 0.0
    %v296 = vand.u32 %v98, 4294901760
    %v297 = vsub.f32 %v98, %v296
    %v298 = vand.u32 %v297, 4294901760
    %v299 = vsub.f32 %v297, %v298
    %v300 = vand.u32 %v299, 4294901760
    %301 = vmatpush1.msra.mxu0 %v300
    %302 = vmatprep.subr.mxu0 0.0
    %303 = vmatpush1.msra.mxu0 0.0
    %304 = vmatprep.subr.mxu0 0.0
    %305 = vmatpush1.msra.mxu0 0.0
    %306 = vmatprep.subr.mxu0 0.0
    %307 = vmatpush1.msra.mxu0 0.0
    %308 = vmatprep.subr.mxu0 0.0
    %309 = vmatpush1.msra.mxu0 0.0
    %310 = vmatprep.subr.mxu0 0.0
    %311 = vmatpush1.msra.mxu0 0.0
    %312 = vmatprep.subr.mxu0 0.0
    %313 = vmatpush1.msra.mxu0 0.0
    %314 = vmatprep.subr.mxu0 0.0
    %315 = vmatpush1.msra.mxu0 0.0
    %316 = vmatprep.subr.mxu0 0.0
    %317 = vmatpush1.msra.mxu0 0.0
    %318 = vmatprep.subr.mxu0 0.0
    %319 = vmatpush1.msra.mxu0 0.0
    %320 = vmatprep.subr.mxu0 0.0
    %321 = vmatpush1.msra.mxu0 0.0
    %322 = vmatprep.subr.mxu0 0.0
    %323 = vmatpush1.msra.mxu0 0.0
    %324 = vmatprep.subr.mxu0 0.0
    %325 = vmatpush1.msra.mxu0 0.0
    %326 = vmatprep.subr.mxu0 0.0
    %327 = vmatpush1.msra.mxu0 0.0
    %328 = vmatprep.subr.mxu0 0.0
    %329 = vmatpush1.msra.mxu0 0.0
    %330 = vmatprep.subr.mxu0 0.0
    %331 = vmatpush1.msra.mxu0 0.0
    %332 = vmatprep.subr.mxu0 0.0
    %333 = vmatpush1.msra.mxu0 0.0
    %334 = vmatprep.mubr.f32.mxu0 0.0
    %v335 = vand.u32 %v82, 4294901760
    %336 = vmatmul.mubr.f32.gmra.mrb[0].mxu0 %v335
    %v337 = vpop.f32.mrb[0].mxu0
    %v338 = vadd.f32 %v187, %v337
    %v339 = vpop.f32.mrb[0].mxu0
    %340 = vdwg.mxu0
    %341 = vmatprep.subr.mxu0 0.0
    %v342 = vand.u32 %v83, 4294901760
    %v343 = vsub.f32 %v83, %v342
    %344 = vmatpush1.msra.mxu0 %v343
    %345 = vmatprep.subr.mxu0 0.0
    %v346 = vand.u32 %v84, 4294901760
    %v347 = vsub.f32 %v84, %v346
    %348 = vmatpush1.msra.mxu0 %v347
    %349 = vmatprep.subr.mxu0 0.0
    %v350 = vand.u32 %v85, 4294901760
    %v351 = vsub.f32 %v85, %v350
    %352 = vmatpush1.msra.mxu0 %v351
    %353 = vmatprep.subr.mxu0 0.0
    %v354 = vand.u32 %v86, 4294901760
    %v355 = vsub.f32 %v86, %v354
    %356 = vmatpush1.msra.mxu0 %v355
    %357 = vmatprep.subr.mxu0 0.0
    %v358 = vand.u32 %v87, 4294901760
    %v359 = vsub.f32 %v87, %v358
    %360 = vmatpush1.msra.mxu0 %v359
    %361 = vmatprep.subr.mxu0 0.0
    %v362 = vand.u32 %v88, 4294901760
    %v363 = vsub.f32 %v88, %v362
    %364 = vmatpush1.msra.mxu0 %v363
    %365 = vmatprep.subr.mxu0 0.0
    %v366 = vand.u32 %v89, 4294901760
    %v367 = vsub.f32 %v89, %v366
    %368 = vmatpush1.msra.mxu0 %v367
    %369 = vmatprep.subr.mxu0 0.0
    %v370 = vand.u32 %v90, 4294901760
    %v371 = vsub.f32 %v90, %v370
    %372 = vmatpush1.msra.mxu0 %v371
    %373 = vmatprep.subr.mxu0 0.0
    %v374 = vand.u32 %v91, 4294901760
    %v375 = vsub.f32 %v91, %v374
    %376 = vmatpush1.msra.mxu0 %v375
    %377 = vmatprep.subr.mxu0 0.0
    %v378 = vand.u32 %v92, 4294901760
    %v379 = vsub.f32 %v92, %v378
    %380 = vmatpush1.msra.mxu0 %v379
    %381 = vmatprep.subr.mxu0 0.0
    %v382 = vand.u32 %v93, 4294901760
    %v383 = vsub.f32 %v93, %v382
    %384 = vmatpush1.msra.mxu0 %v383
    %385 = vmatprep.subr.mxu0 0.0
    %v386 = vand.u32 %v94, 4294901760
    %v387 = vsub.f32 %v94, %v386
    %388 = vmatpush1.msra.mxu0 %v387
    %389 = vmatprep.subr.mxu0 0.0
    %v390 = vand.u32 %v95, 4294901760
    %v391 = vsub.f32 %v95, %v390
    %392 = vmatpush1.msra.mxu0 %v391
    %393 = vmatprep.subr.mxu0 0.0
    %v394 = vand.u32 %v96, 4294901760
    %v395 = vsub.f32 %v96, %v394
    %396 = vmatpush1.msra.mxu0 %v395
    %397 = vmatprep.subr.mxu0 0.0
    %v398 = vand.u32 %v97, 4294901760
    %v399 = vsub.f32 %v97, %v398
    %400 = vmatpush1.msra.mxu0 %v399
    %401 = vmatprep.subr.mxu0 0.0
    %v402 = vand.u32 %v98, 4294901760
    %v403 = vsub.f32 %v98, %v402
    %404 = vmatpush1.msra.mxu0 %v403
    %405 = vmatprep.subr.mxu0 0.0
    %406 = vmatpush1.msra.mxu0 0.0
    %407 = vmatprep.subr.mxu0 0.0
    %408 = vmatpush1.msra.mxu0 0.0
    %409 = vmatprep.subr.mxu0 0.0
    %410 = vmatpush1.msra.mxu0 0.0
    %411 = vmatprep.subr.mxu0 0.0
    %412 = vmatpush1.msra.mxu0 0.0
    %413 = vmatprep.subr.mxu0 0.0
    %414 = vmatpush1.msra.mxu0 0.0
    %415 = vmatprep.subr.mxu0 0.0
    %416 = vmatpush1.msra.mxu0 0.0
    %417 = vmatprep.subr.mxu0 0.0
    %418 = vmatpush1.msra.mxu0 0.0
    %419 = vmatprep.subr.mxu0 0.0
    %420 = vmatpush1.msra.mxu0 0.0
    %421 = vmatprep.subr.mxu0 0.0
    %422 = vmatpush1.msra.mxu0 0.0
    %423 = vmatprep.subr.mxu0 0.0
    %424 = vmatpush1.msra.mxu0 0.0
    %425 = vmatprep.subr.mxu0 0.0
    %426 = vmatpush1.msra.mxu0 0.0
    %427 = vmatprep.subr.mxu0 0.0
    %428 = vmatpush1.msra.mxu0 0.0
    %429 = vmatprep.subr.mxu0 0.0
    %430 = vmatpush1.msra.mxu0 0.0
    %431 = vmatprep.subr.mxu0 0.0
    %432 = vmatpush1.msra.mxu0 0.0
    %433 = vmatprep.subr.mxu0 0.0
    %434 = vmatpush1.msra.mxu0 0.0
    %435 = vmatprep.subr.mxu0 0.0
    %436 = vmatpush1.msra.mxu0 0.0
    %437 = vmatprep.mubr.f32.mxu0 0.0
    %v438 = vand.u32 %v82, 4294901760
    %v439 = vsub.f32 %v82, %v438
    %440 = vmatmul.mubr.f32.gmra.mrb[0].mxu0 %v439
    %v441 = vpop.f32.mrb[0].mxu0
    %v442 = vadd.f32 %v338, %v441
    %v443 = vpop.f32.mrb[0].mxu0
    %444 = vdwg.mxu0
    %445 = vmatprep.subr.mxu0 0.0
    %v446 = vand.u32 %v83, 4294901760
    %447 = vmatpush1.msra.mxu0 %v446
    %448 = vmatprep.subr.mxu0 0.0
    %v449 = vand.u32 %v84, 4294901760
    %450 = vmatpush1.msra.mxu0 %v449
    %451 = vmatprep.subr.mxu0 0.0
    %v452 = vand.u32 %v85, 4294901760
    %453 = vmatpush1.msra.mxu0 %v452
    %454 = vmatprep.subr.mxu0 0.0
    %v455 = vand.u32 %v86, 4294901760
    %456 = vmatpush1.msra.mxu0 %v455
    %457 = vmatprep.subr.mxu0 0.0
    %v458 = vand.u32 %v87, 4294901760
    %459 = vmatpush1.msra.mxu0 %v458
    %460 = vmatprep.subr.mxu0 0.0
    %v461 = vand.u32 %v88, 4294901760
    %462 = vmatpush1.msra.mxu0 %v461
    %463 = vmatprep.subr.mxu0 0.0
    %v464 = vand.u32 %v89, 4294901760
    %465 = vmatpush1.msra.mxu0 %v464
    %466 = vmatprep.subr.mxu0 0.0
    %v467 = vand.u32 %v90, 4294901760
    %468 = vmatpush1.msra.mxu0 %v467
    %469 = vmatprep.subr.mxu0 0.0
    %v470 = vand.u32 %v91, 4294901760
    %471 = vmatpush1.msra.mxu0 %v470
    %472 = vmatprep.subr.mxu0 0.0
    %v473 = vand.u32 %v92, 4294901760
    %474 = vmatpush1.msra.mxu0 %v473
    %475 = vmatprep.subr.mxu0 0.0
    %v476 = vand.u32 %v93, 4294901760
    %477 = vmatpush1.msra.mxu0 %v476
    %478 = vmatprep.subr.mxu0 0.0
    %v479 = vand.u32 %v94, 4294901760
    %480 = vmatpush1.msra.mxu0 %v479
    %481 = vmatprep.subr.mxu0 0.0
    %v482 = vand.u32 %v95, 4294901760
    %483 = vmatpush1.msra.mxu0 %v482
    %484 = vmatprep.subr.mxu0 0.0
    %v485 = vand.u32 %v96, 4294901760
    %486 = vmatpush1.msra.mxu0 %v485
    %487 = vmatprep.subr.mxu0 0.0
    %v488 = vand.u32 %v97, 4294901760
    %489 = vmatpush1.msra.mxu0 %v488
    %490 = vmatprep.subr.mxu0 0.0
    %v491 = vand.u32 %v98, 4294901760
    %492 = vmatpush1.msra.mxu0 %v491
    %493 = vmatprep.subr.mxu0 0.0
    %494 = vmatpush1.msra.mxu0 0.0
    %495 = vmatprep.subr.mxu0 0.0
    %496 = vmatpush1.msra.mxu0 0.0
    %497 = vmatprep.subr.mxu0 0.0
    %498 = vmatpush1.msra.mxu0 0.0
    %499 = vmatprep.subr.mxu0 0.0
    %500 = vmatpush1.msra.mxu0 0.0
    %501 = vmatprep.subr.mxu0 0.0
    %502 = vmatpush1.msra.mxu0 0.0
    %503 = vmatprep.subr.mxu0 0.0
    %504 = vmatpush1.msra.mxu0 0.0
    %505 = vmatprep.subr.mxu0 0.0
    %506 = vmatpush1.msra.mxu0 0.0
    %507 = vmatprep.subr.mxu0 0.0
    %508 = vmatpush1.msra.mxu0 0.0
    %509 = vmatprep.subr.mxu0 0.0
    %510 = vmatpush1.msra.mxu0 0.0
    %511 = vmatprep.subr.mxu0 0.0
    %512 = vmatpush1.msra.mxu0 0.0
    %513 = vmatprep.subr.mxu0 0.0
    %514 = vmatpush1.msra.mxu0 0.0
    %515 = vmatprep.subr.mxu0 0.0
    %516 = vmatpush1.msra.mxu0 0.0
    %517 = vmatprep.subr.mxu0 0.0
    %518 = vmatpush1.msra.mxu0 0.0
    %519 = vmatprep.subr.mxu0 0.0
    %520 = vmatpush1.msra.mxu0 0.0
    %521 = vmatprep.subr.mxu0 0.0
    %522 = vmatpush1.msra.mxu0 0.0
    %523 = vmatprep.subr.mxu0 0.0
    %524 = vmatpush1.msra.mxu0 0.0
    %525 = vmatprep.mubr.f32.mxu0 0.0
    %v526 = vand.u32 %v82, 4294901760
    %v527 = vsub.f32 %v82, %v526
    %v528 = vand.u32 %v527, 4294901760
    %529 = vmatmul.mubr.f32.gmra.mrb[0].mxu0 %v528
    %v530 = vpop.f32.mrb[0].mxu0
    %v531 = vadd.f32 %v442, %v530
    %v532 = vpop.f32.mrb[0].mxu0
    %533 = vdwg.mxu0
    %534 = vmatprep.subr.mxu0 0.0
    %v535 = vand.u32 %v83, 4294901760
    %v536 = vsub.f32 %v83, %v535
    %v537 = vand.u32 %v536, 4294901760
    %538 = vmatpush1.msra.mxu0 %v537
    %539 = vmatprep.subr.mxu0 0.0
    %v540 = vand.u32 %v84, 4294901760
    %v541 = vsub.f32 %v84, %v540
    %v542 = vand.u32 %v541, 4294901760
    %543 = vmatpush1.msra.mxu0 %v542
    %544 = vmatprep.subr.mxu0 0.0
    %v545 = vand.u32 %v85, 4294901760
    %v546 = vsub.f32 %v85, %v545
    %v547 = vand.u32 %v546, 4294901760
    %548 = vmatpush1.msra.mxu0 %v547
    %549 = vmatprep.subr.mxu0 0.0
    %v550 = vand.u32 %v86, 4294901760
    %v551 = vsub.f32 %v86, %v550
    %v552 = vand.u32 %v551, 4294901760
    %553 = vmatpush1.msra.mxu0 %v552
    %554 = vmatprep.subr.mxu0 0.0
    %v555 = vand.u32 %v87, 4294901760
    %v556 = vsub.f32 %v87, %v555
    %v557 = vand.u32 %v556, 4294901760
    %558 = vmatpush1.msra.mxu0 %v557
    %559 = vmatprep.subr.mxu0 0.0
    %v560 = vand.u32 %v88, 4294901760
    %v561 = vsub.f32 %v88, %v560
    %v562 = vand.u32 %v561, 4294901760
    %563 = vmatpush1.msra.mxu0 %v562
    %564 = vmatprep.subr.mxu0 0.0
    %v565 = vand.u32 %v89, 4294901760
    %v566 = vsub.f32 %v89, %v565
    %v567 = vand.u32 %v566, 4294901760
    %568 = vmatpush1.msra.mxu0 %v567
    %569 = vmatprep.subr.mxu0 0.0
    %v570 = vand.u32 %v90, 4294901760
    %v571 = vsub.f32 %v90, %v570
    %v572 = vand.u32 %v571, 4294901760
    %573 = vmatpush1.msra.mxu0 %v572
    %574 = vmatprep.subr.mxu0 0.0
    %v575 = vand.u32 %v91, 4294901760
    %v576 = vsub.f32 %v91, %v575
    %v577 = vand.u32 %v576, 4294901760
    %578 = vmatpush1.msra.mxu0 %v577
    %579 = vmatprep.subr.mxu0 0.0
    %v580 = vand.u32 %v92, 4294901760
    %v581 = vsub.f32 %v92, %v580
    %v582 = vand.u32 %v581, 4294901760
    %583 = vmatpush1.msra.mxu0 %v582
    %584 = vmatprep.subr.mxu0 0.0
    %v585 = vand.u32 %v93, 4294901760
    %v586 = vsub.f32 %v93, %v585
    %v587 = vand.u32 %v586, 4294901760
    %588 = vmatpush1.msra.mxu0 %v587
    %589 = vmatprep.subr.mxu0 0.0
    %v590 = vand.u32 %v94, 4294901760
    %v591 = vsub.f32 %v94, %v590
    %v592 = vand.u32 %v591, 4294901760
    %593 = vmatpush1.msra.mxu0 %v592
    %594 = vmatprep.subr.mxu0 0.0
    %v595 = vand.u32 %v95, 4294901760
    %v596 = vsub.f32 %v95, %v595
    %v597 = vand.u32 %v596, 4294901760
    %598 = vmatpush1.msra.mxu0 %v597
    %599 = vmatprep.subr.mxu0 0.0
    %v600 = vand.u32 %v96, 4294901760
    %v601 = vsub.f32 %v96, %v600
    %v602 = vand.u32 %v601, 4294901760
    %603 = vmatpush1.msra.mxu0 %v602
    %604 = vmatprep.subr.mxu0 0.0
    %v605 = vand.u32 %v97, 4294901760
    %v606 = vsub.f32 %v97, %v605
    %v607 = vand.u32 %v606, 4294901760
    %608 = vmatpush1.msra.mxu0 %v607
    %609 = vmatprep.subr.mxu0 0.0
    %v610 = vand.u32 %v98, 4294901760
    %v611 = vsub.f32 %v98, %v610
    %v612 = vand.u32 %v611, 4294901760
    %613 = vmatpush1.msra.mxu0 %v612
    %614 = vmatprep.subr.mxu0 0.0
    %615 = vmatpush1.msra.mxu0 0.0
    %616 = vmatprep.subr.mxu0 0.0
    %617 = vmatpush1.msra.mxu0 0.0
    %618 = vmatprep.subr.mxu0 0.0
    %619 = vmatpush1.msra.mxu0 0.0
    %620 = vmatprep.subr.mxu0 0.0
    %621 = vmatpush1.msra.mxu0 0.0
    %622 = vmatprep.subr.mxu0 0.0
    %623 = vmatpush1.msra.mxu0 0.0
    %624 = vmatprep.subr.mxu0 0.0
    %625 = vmatpush1.msra.mxu0 0.0
    %626 = vmatprep.subr.mxu0 0.0
    %627 = vmatpush1.msra.mxu0 0.0
    %628 = vmatprep.subr.mxu0 0.0
    %629 = vmatpush1.msra.mxu0 0.0
    %630 = vmatprep.subr.mxu0 0.0
    %631 = vmatpush1.msra.mxu0 0.0
    %632 = vmatprep.subr.mxu0 0.0
    %633 = vmatpush1.msra.mxu0 0.0
    %634 = vmatprep.subr.mxu0 0.0
    %635 = vmatpush1.msra.mxu0 0.0
    %636 = vmatprep.subr.mxu0 0.0
    %637 = vmatpush1.msra.mxu0 0.0
    %638 = vmatprep.subr.mxu0 0.0
    %639 = vmatpush1.msra.mxu0 0.0
    %640 = vmatprep.subr.mxu0 0.0
    %641 = vmatpush1.msra.mxu0 0.0
    %642 = vmatprep.subr.mxu0 0.0
    %643 = vmatpush1.msra.mxu0 0.0
    %644 = vmatprep.subr.mxu0 0.0
    %645 = vmatpush1.msra.mxu0 0.0
    %646 = vmatprep.mubr.f32.mxu0 0.0
    %v647 = vand.u32 %v82, 4294901760
    %648 = vmatmul.mubr.f32.gmra.mrb[0].mxu0 %v647
    %v649 = vpop.f32.mrb[0].mxu0
    %v650 = vadd.f32 %v531, %v649
    %v651 = vpop.f32.mrb[0].mxu0
    %652 = vdwg.mxu0
    %653 = vmatprep.subr.mxu0 0.0
    %v654 = vand.u32 %v83, 4294901760
    %655 = vmatpush1.msra.mxu0 %v654
    %656 = vmatprep.subr.mxu0 0.0
    %v657 = vand.u32 %v84, 4294901760
    %658 = vmatpush1.msra.mxu0 %v657
    %659 = vmatprep.subr.mxu0 0.0
    %v660 = vand.u32 %v85, 4294901760
    %661 = vmatpush1.msra.mxu0 %v660
    %662 = vmatprep.subr.mxu0 0.0
    %v663 = vand.u32 %v86, 4294901760
    %664 = vmatpush1.msra.mxu0 %v663
    %665 = vmatprep.subr.mxu0 0.0
    %v666 = vand.u32 %v87, 4294901760
    %667 = vmatpush1.msra.mxu0 %v666
    %668 = vmatprep.subr.mxu0 0.0
    %v669 = vand.u32 %v88, 4294901760
    %670 = vmatpush1.msra.mxu0 %v669
    %671 = vmatprep.subr.mxu0 0.0
    %v672 = vand.u32 %v89, 4294901760
    %673 = vmatpush1.msra.mxu0 %v672
    %674 = vmatprep.subr.mxu0 0.0
    %v675 = vand.u32 %v90, 4294901760
    %676 = vmatpush1.msra.mxu0 %v675
    %677 = vmatprep.subr.mxu0 0.0
    %v678 = vand.u32 %v91, 4294901760
    %679 = vmatpush1.msra.mxu0 %v678
    %680 = vmatprep.subr.mxu0 0.0
    %v681 = vand.u32 %v92, 4294901760
    %682 = vmatpush1.msra.mxu0 %v681
    %683 = vmatprep.subr.mxu0 0.0
    %v684 = vand.u32 %v93, 4294901760
    %685 = vmatpush1.msra.mxu0 %v684
    %686 = vmatprep.subr.mxu0 0.0
    %v687 = vand.u32 %v94, 4294901760
    %688 = vmatpush1.msra.mxu0 %v687
    %689 = vmatprep.subr.mxu0 0.0
    %v690 = vand.u32 %v95, 4294901760
    %691 = vmatpush1.msra.mxu0 %v690
    %692 = vmatprep.subr.mxu0 0.0
    %v693 = vand.u32 %v96, 4294901760
    %694 = vmatpush1.msra.mxu0 %v693
    %695 = vmatprep.subr.mxu0 0.0
    %v696 = vand.u32 %v97, 4294901760
    %697 = vmatpush1.msra.mxu0 %v696
    %698 = vmatprep.subr.mxu0 0.0
    %v699 = vand.u32 %v98, 4294901760
    %700 = vmatpush1.msra.mxu0 %v699
    %701 = vmatprep.subr.mxu0 0.0
    %702 = vmatpush1.msra.mxu0 0.0
    %703 = vmatprep.subr.mxu0 0.0
    %704 = vmatpush1.msra.mxu0 0.0
    %705 = vmatprep.subr.mxu0 0.0
    %706 = vmatpush1.msra.mxu0 0.0
    %707 = vmatprep.subr.mxu0 0.0
    %708 = vmatpush1.msra.mxu0 0.0
    %709 = vmatprep.subr.mxu0 0.0
    %710 = vmatpush1.msra.mxu0 0.0
    %711 = vmatprep.subr.mxu0 0.0
    %712 = vmatpush1.msra.mxu0 0.0
    %713 = vmatprep.subr.mxu0 0.0
    %714 = vmatpush1.msra.mxu0 0.0
    %715 = vmatprep.subr.mxu0 0.0
    %716 = vmatpush1.msra.mxu0 0.0
    %717 = vmatprep.subr.mxu0 0.0
    %718 = vmatpush1.msra.mxu0 0.0
    %719 = vmatprep.subr.mxu0 0.0
    %720 = vmatpush1.msra.mxu0 0.0
    %721 = vmatprep.subr.mxu0 0.0
    %722 = vmatpush1.msra.mxu0 0.0
    %723 = vmatprep.subr.mxu0 0.0
    %724 = vmatpush1.msra.mxu0 0.0
    %725 = vmatprep.subr.mxu0 0.0
    %726 = vmatpush1.msra.mxu0 0.0
    %727 = vmatprep.subr.mxu0 0.0
    %728 = vmatpush1.msra.mxu0 0.0
    %729 = vmatprep.subr.mxu0 0.0
    %730 = vmatpush1.msra.mxu0 0.0
    %731 = vmatprep.subr.mxu0 0.0
    %732 = vmatpush1.msra.mxu0 0.0
    %733 = vmatprep.mubr.f32.mxu0 0.0
    %v734 = vand.u32 %v82, 4294901760
    %735 = vmatmul.mubr.f32.gmra.mrb[0].mxu0 %v734
    %v736 = vpop.f32.mrb[0].mxu0
    %v737 = vadd.f32 %v650, %v736
    %v738 = vpop.f32.mrb[0].mxu0
    %739 = vdwg.mxu0
    %v740 = vld [vmem:[#allocation2] sm:$0xf]
    %v741 = vadd.f32 %v740, %v737
    %742 = vst [vmem:[#allocation8] sm:$0xf] %v741
    // Predicated region
    $region26: #{tpu_custom_call.1} parent=1 // pred_check
      _
    $region27: #{tpu_custom_call.1} parent=1 // pred_check_branch
      %744 = sbr.rel (0) target = $region29
    $region28: #{tpu_custom_call.1} parent=1 // pred_region
      %s746 = ssub.s32 64, 64
      %747 = vsyncadd [#allocation4], %s746
      %s749 = sshll.u32 [#allocation8], 4
      %s750 = int_to_ptr.vmem [resolvable:$true] %s749
      %752 = dma.vmem_to_hbm [thread:$0]  %s750, 64, %s3, [#allocation4]
    $region29: #{tpu_custom_call.1} parent=1 // pred_fallthru
      _
    // Predicated region
    $region30: #{tpu_custom_call.1} parent=1 // pred_check
      _
    $region31: #{tpu_custom_call.1} parent=1 // pred_check_branch
      %754 = sbr.rel (0) target = $region33
    $region32: #{tpu_custom_call.1} parent=1 // pred_region
      %755 = dma.done [#allocation4], 64
    $region33: #{tpu_custom_call.1} parent=1 // pred_fallthru
      _
    %756 = vsyncpa [#allocation3], 1
    %757 = vsyncpa [#allocation6], 1
    %758 = vsyncpa [#allocation4], 1

</llo_original>
